<compile_context>
chip_gen: v7x
topology: tpu7x:2x2x1
jax: 0.10.0
libtpu: 0.0.40
codegen_flags: <defaults>
</compile_context>

<pallas_src>
import functools
import math

import numpy as np
import jax
import jax.numpy as jnp
from jax.experimental import pallas as pl
from jax.experimental.pallas import tpu as pltpu


def _round_up(v, m):
    return -(-v // m) * m


def _eloc_kernel(x_ref, rhs_ref, b1_ref, w2_ref, c_ref, gram_ref, sh_ref, sp_ref,
                 o_ref, *, hlane, inv_two_sigma_sq):
    x = x_ref[...]                                                        # (TB, k*N)

    # Single fused MXU push:  res = x @ [W1_blk | D_blk]
    res = jnp.dot(x, rhs_ref[...], preferred_element_type=jnp.float32)   # (TB, Hlane+L)
    z = res[:, :hlane] + b1_ref[...]                                     # (TB, Hlane)
    diff = res[:, hlane:]                                                # (TB, L)

    # ---- kinetic: -0.5 * (lap(log psi) + |grad log psi|^2), closed form --------------
    t = jnp.tanh(z)
    s = 1.0 - t * t                                                      # sech^2(z)
    g = w2_ref[...] * s                                                  # (TB, Hlane)
    gg = jnp.dot(g, gram_ref[...], preferred_element_type=jnp.float32)   # g @ G (block-diag)
    kin_terms = c_ref[...] * (t * s) + gg * g                            # lap + grad_sq, per lane
    # Segmented per-walker sum; the -0.5 factor is folded into sh_ref in the wrapper.
    kin = jnp.dot(kin_terms, sh_ref[...], preferred_element_type=jnp.float32)   # (TB, k)

    # ---- Gaussian pair interaction (strict upper triangle, lane-dense packed) --------
    gauss = jnp.exp(-(diff * diff) * inv_two_sigma_sq)                   # (TB, L)
    # Segmented per-walker sum; gauss_const folded into sp_ref; padded columns select 0.
    pair = jnp.dot(gauss, sp_ref[...], preferred_element_type=jnp.float32)      # (TB, k)

    o_ref[...] = kin + pair


def _choose_tb(R, row_bytes, resident_bytes):
    """Batch-tile (packed rows) from a VMEM budget that also fits v7x's smaller VMEM."""
    budget = 24 * 1024 * 1024
    avail = max(budget - resident_bytes, 256 * 1024)
    tb = min(int(avail // max(row_bytes, 1)), 1024)
    # Keep >= 2 grid steps when there are enough rows, so the "parallel" batch axis can
    # actually shard across both TensorCores on v7x.
    tb = min(tb, _round_up(max(-(-R // 2), 1), 8))
    tb = max(8, (tb // 8) * 8)
    return tb


def gaussian_interaction_1d_forward(x, w1, b1, w2, *, V0, sigma0):
    """Pallas-backed equivalent of GaussianInteraction1D.forward (returns (B,) local energy)."""
    x = jnp.asarray(x, jnp.float32)
    B, N = x.shape
    w1_np = np.asarray(w1, np.float32)
    b1_np = np.asarray(b1, np.float32).reshape(-1)
    w2_np = np.asarray(w2, np.float32).reshape(-1)
    H = w1_np.shape[1]

    P = N * (N - 1) // 2
    # Pack k walkers per 128-lane pair group (cuts padded EUP exp work at small N).
    k = max(1, min(128 // max(P, 1), 8))
    Hlane = _round_up(k * H, 128)
    L = _round_up(max(k * P, 1), 128)

    gauss_const = float(V0 / (math.sqrt(2.0 * math.pi) * sigma0))
    inv_two_sigma_sq = float(1.0 / (2.0 * sigma0 ** 2))

    # ---- hoisted, packed weight constants (built once per shape on host) -------------
    c_np = -2.0 * w2_np * np.sum(w1_np * w1_np, axis=0)                  # (H,)
    G_np = w1_np.T @ w1_np                                               # (H, H) Gram

    W1_blk = np.zeros((k * N, Hlane), np.float32)
    D_blk = np.zeros((k * N, L), np.float32)
    G_blk = np.zeros((Hlane, Hlane), np.float32)
    b1_pk = np.zeros((1, Hlane), np.float32)
    w2_pk = np.zeros((1, Hlane), np.float32)
    c_pk = np.zeros((1, Hlane), np.float32)
    S_H = np.zeros((Hlane, k), np.float32)
    S_P = np.zeros((L, k), np.float32)

    iu_rows, iu_cols = np.triu_indices(N, k=1)
    for a in range(k):
        W1_blk[a * N:(a + 1) * N, a * H:(a + 1) * H] = w1_np
        G_blk[a * H:(a + 1) * H, a * H:(a + 1) * H] = G_np
        b1_pk[0, a * H:(a + 1) * H] = b1_np
        w2_pk[0, a * H:(a + 1) * H] = w2_np
        c_pk[0, a * H:(a + 1) * H] = c_np
        S_H[a * H:(a + 1) * H, a] = -0.5                # folds the -0.5 kinetic factor
        if P > 0:
            pcols = a * P + np.arange(P)
            D_blk[a * N + iu_rows, pcols] = 1.0
            D_blk[a * N + iu_cols, pcols] = -1.0
            S_P[pcols, a] = gauss_const                 # folds the Gaussian prefactor

    rhs = jnp.asarray(np.concatenate([W1_blk, D_blk], axis=1))            # (k*N, Hlane+L)

    # ---- batch packing / tiling -------------------------------------------------------
    R = -(-B // k)                                                        # packed rows needed
    row_bytes = 4 * (k * N + 3 * (Hlane + L) + 6 * Hlane + k) * 2         # f32 + dbl-buffer slack
    resident_bytes = 4 * (k * N * (Hlane + L) + Hlane * Hlane
                          + (Hlane + L) * k + 3 * Hlane)
    TB = _choose_tb(R, row_bytes, resident_bytes)
    R_pad = _round_up(R, TB)
    B_need = R_pad * k
    if B_need != B:
        # Only the trailing pad rows are appended (zeros -> finite, discarded by [:B]).
        x = jnp.concatenate([x, jnp.zeros((B_need - B, N), jnp.float32)], axis=0)
    x_packed = x.reshape(R_pad, k * N)

    kernel = functools.partial(_eloc_kernel, hlane=Hlane,
                               inv_two_sigma_sq=inv_two_sigma_sq)

    out = pl.pallas_call(
        kernel,
        out_shape=jax.ShapeDtypeStruct((R_pad, k), jnp.float32),
        grid_spec=pl.GridSpec(
            grid=(R_pad // TB,),
            in_specs=[
                pl.BlockSpec((TB, k * N), lambda i: (i, 0)),        # packed x: batch-tiled
                pl.BlockSpec((k * N, Hlane + L), lambda i: (0, 0)),  # fused [W1|D]: resident
                pl.BlockSpec((1, Hlane), lambda i: (0, 0)),          # b1 (packed)
                pl.BlockSpec((1, Hlane), lambda i: (0, 0)),          # w2 (packed)
                pl.BlockSpec((1, Hlane), lambda i: (0, 0)),          # c  (hoisted, packed)
                pl.BlockSpec((Hlane, Hlane), lambda i: (0, 0)),      # block-diag Gram
                pl.BlockSpec((Hlane, k), lambda i: (0, 0)),          # kinetic selection (-0.5)
                pl.BlockSpec((L, k), lambda i: (0, 0)),              # pair selection (gauss_const)
            ],
            out_specs=pl.BlockSpec((TB, k), lambda i: (i, 0)),
        ),
        compiler_params=pltpu.CompilerParams(
            dimension_semantics=("parallel",),
            vmem_limit_bytes=32 * 1024 * 1024,
        ),
    )(x_packed, rhs, jnp.asarray(b1_pk), jnp.asarray(w2_pk), jnp.asarray(c_pk),
      jnp.asarray(G_blk), jnp.asarray(S_H), jnp.asarray(S_P))

    return out.reshape(-1)[:B]


# ---------------- pure-JAX reference (autodiff, mirrors the PyTorch semantics) ----------------
def _log_psi_single(xi, w1, b1, w2):
    return jnp.sum(w2 * jnp.tanh(xi @ w1 + b1))


def ref_forward(x, w1, b1, w2, *, V0, sigma0):
    gauss_const = V0 / (math.sqrt(2.0 * math.pi) * sigma0)

    def kin_one(xi):
        g = jax.grad(_log_psi_single)(xi, w1, b1, w2)
        h = jax.hessian(_log_psi_single)(xi, w1, b1, w2)
        return -0.5 * (jnp.trace(h) + jnp.sum(g * g))

    kin = jax.vmap(kin_one)(x)
    diff = x[:, None, :] - x[:, :, None]
    gauss = jnp.exp(-(diff ** 2) / (2.0 * sigma0 ** 2))
    N = x.shape[1]
    mask = jnp.triu(jnp.ones((N, N), dtype=x.dtype), k=1)
    inter = gauss_const * jnp.sum(gauss * mask, axis=(-2, -1))
    return kin + inter


if __name__ == "__main__":
    B, N, H = 8, 8, 32           # walkers, particles, hidden units of the synthetic net
    V0, sigma0 = 1.5, 0.5

    key = jax.random.PRNGKey(0)
    kx, kw1, kb1, kw2 = jax.random.split(key, 4)
    x = jax.random.normal(kx, (B, N), dtype=jnp.float32)
    w1 = jax.random.normal(kw1, (N, H), dtype=jnp.float32) * 0.3
    b1 = jax.random.normal(kb1, (H,), dtype=jnp.float32) * 0.1
    w2 = jax.random.normal(kw2, (H,), dtype=jnp.float32) * 0.3

    eloc = gaussian_interaction_1d_forward(x, w1, b1, w2, V0=V0, sigma0=sigma0)
    eloc = jax.block_until_ready(eloc)

    eloc_ref = ref_forward(x, w1, b1, w2, V0=V0, sigma0=sigma0)
    assert eloc.shape == (B,)
    assert jnp.allclose(eloc, eloc_ref, rtol=1e-4, atol=1e-4), (eloc, eloc_ref)

    print("KERNEL_OK")
</pallas_src>

<mosaic_0001>
module attributes {stable_mosaic.version = 11 : i64} {
  func.func @_eloc_kernel(%arg0: i32, %arg1: memref<8x32xf32, #tpu.memory_space<vmem>>, %arg2: memref<32x256xf32, #tpu.memory_space<vmem>>, %arg3: memref<1x128xf32, #tpu.memory_space<vmem>>, %arg4: memref<1x128xf32, #tpu.memory_space<vmem>>, %arg5: memref<1x128xf32, #tpu.memory_space<vmem>>, %arg6: memref<128x128xf32, #tpu.memory_space<vmem>>, %arg7: memref<128x4xf32, #tpu.memory_space<vmem>>, %arg8: memref<128x4xf32, #tpu.memory_space<vmem>>, %arg9: memref<8x4xf32, #tpu.memory_space<vmem>>) attributes {dimension_semantics = [#tpu.dimension_semantics<parallel>], iteration_bounds = array<i64: 1>, scalar_prefetch = 0 : i64, scratch_operands = 0 : i64, tpu.core_type = #tpu.core_type<tc>, window_params = [{transform_indices = @transform_0, window_bounds = array<i64: 8, 32>}, {pipeline_mode = #tpu.pipeline_mode<synchronous>, transform_indices = @transform_1, window_bounds = array<i64: 32, 256>}, {pipeline_mode = #tpu.pipeline_mode<synchronous>, transform_indices = @transform_2, window_bounds = array<i64: 1, 128>}, {pipeline_mode = #tpu.pipeline_mode<synchronous>, transform_indices = @transform_3, window_bounds = array<i64: 1, 128>}, {pipeline_mode = #tpu.pipeline_mode<synchronous>, transform_indices = @transform_4, window_bounds = array<i64: 1, 128>}, {pipeline_mode = #tpu.pipeline_mode<synchronous>, transform_indices = @transform_5, window_bounds = array<i64: 128, 128>}, {pipeline_mode = #tpu.pipeline_mode<synchronous>, transform_indices = @transform_6, window_bounds = array<i64: 128, 4>}, {pipeline_mode = #tpu.pipeline_mode<synchronous>, transform_indices = @transform_7, window_bounds = array<i64: 128, 4>}, {transform_indices = @transform_8, window_bounds = array<i64: 8, 4>}]} {
    %c0 = arith.constant 0 : index
    %c0_0 = arith.constant 0 : index
    %0 = vector.load %arg1[%c0, %c0_0] : memref<8x32xf32, #tpu.memory_space<vmem>>, vector<8x32xf32>
    %c0_1 = arith.constant 0 : index
    %c0_2 = arith.constant 0 : index
    %1 = vector.load %arg2[%c0_1, %c0_2] : memref<32x256xf32, #tpu.memory_space<vmem>>, vector<32x256xf32>
    %cst = arith.constant dense<0.000000e+00> : vector<8x256xf32>
    %2 = tpu.matmul %0, %1, %cst {dimension_numbers = #tpu.dot_dimension_numbers<[1], [0], [0], [1], [0, 0, 1, 1], [], []>} : vector<8x32xf32>, vector<32x256xf32>, vector<8x256xf32> -> vector<8x256xf32>
    %3 = vector.extract_strided_slice %2 {offsets = [0, 0], sizes = [8, 128], strides = [1, 1]} : vector<8x256xf32> to vector<8x128xf32>
    %c0_3 = arith.constant 0 : index
    %c0_4 = arith.constant 0 : index
    %4 = vector.load %arg3[%c0_3, %c0_4] : memref<1x128xf32, #tpu.memory_space<vmem>>, vector<1x128xf32>
    %5 = vector.broadcast %4 : vector<1x128xf32> to vector<8x128xf32>
    %6 = arith.addf %3, %5 : vector<8x128xf32>
    %7 = vector.extract_strided_slice %2 {offsets = [0, 128], sizes = [8, 128], strides = [1, 1]} : vector<8x256xf32> to vector<8x128xf32>
    %8 = math.tanh %6 : vector<8x128xf32>
    %9 = arith.mulf %8, %8 : vector<8x128xf32>
    %cst_5 = arith.constant 1.000000e+00 : f32
    %10 = vector.broadcast %cst_5 : f32 to vector<8x128xf32>
    %11 = arith.subf %10, %9 : vector<8x128xf32>
    %c0_6 = arith.constant 0 : index
    %c0_7 = arith.constant 0 : index
    %12 = vector.load %arg4[%c0_6, %c0_7] : memref<1x128xf32, #tpu.memory_space<vmem>>, vector<1x128xf32>
    %13 = vector.broadcast %12 : vector<1x128xf32> to vector<8x128xf32>
    %14 = arith.mulf %13, %11 : vector<8x128xf32>
    %c0_8 = arith.constant 0 : index
    %c0_9 = arith.constant 0 : index
    %15 = vector.load %arg6[%c0_8, %c0_9] : memref<128x128xf32, #tpu.memory_space<vmem>>, vector<128x128xf32>
    %cst_10 = arith.constant dense<0.000000e+00> : vector<8x128xf32>
    %16 = tpu.matmul %14, %15, %cst_10 {dimension_numbers = #tpu.dot_dimension_numbers<[1], [0], [0], [1], [0, 0, 1, 1], [], []>} : vector<8x128xf32>, vector<128x128xf32>, vector<8x128xf32> -> vector<8x128xf32>
    %c0_11 = arith.constant 0 : index
    %c0_12 = arith.constant 0 : index
    %17 = vector.load %arg5[%c0_11, %c0_12] : memref<1x128xf32, #tpu.memory_space<vmem>>, vector<1x128xf32>
    %18 = arith.mulf %8, %11 : vector<8x128xf32>
    %19 = vector.broadcast %17 : vector<1x128xf32> to vector<8x128xf32>
    %20 = arith.mulf %19, %18 : vector<8x128xf32>
    %21 = arith.mulf %16, %14 : vector<8x128xf32>
    %22 = arith.addf %20, %21 : vector<8x128xf32>
    %c0_13 = arith.constant 0 : index
    %c0_14 = arith.constant 0 : index
    %23 = vector.load %arg7[%c0_13, %c0_14] : memref<128x4xf32, #tpu.memory_space<vmem>>, vector<128x4xf32>
    %cst_15 = arith.constant dense<0.000000e+00> : vector<8x4xf32>
    %24 = tpu.matmul %22, %23, %cst_15 {dimension_numbers = #tpu.dot_dimension_numbers<[1], [0], [0], [1], [0, 0, 1, 1], [], []>} : vector<8x128xf32>, vector<128x4xf32>, vector<8x4xf32> -> vector<8x4xf32>
    %25 = arith.mulf %7, %7 : vector<8x128xf32>
    %cst_16 = arith.constant 0.000000e+00 : f32
    %26 = vector.broadcast %cst_16 : f32 to vector<8x128xf32>
    %27 = arith.subf %26, %25 : vector<8x128xf32>
    %cst_17 = arith.constant 2.000000e+00 : f32
    %28 = vector.broadcast %cst_17 : f32 to vector<8x128xf32>
    %29 = arith.mulf %27, %28 : vector<8x128xf32>
    %30 = math.exp %29 : vector<8x128xf32>
    %c0_18 = arith.constant 0 : index
    %c0_19 = arith.constant 0 : index
    %31 = vector.load %arg8[%c0_18, %c0_19] : memref<128x4xf32, #tpu.memory_space<vmem>>, vector<128x4xf32>
    %cst_20 = arith.constant dense<0.000000e+00> : vector<8x4xf32>
    %32 = tpu.matmul %30, %31, %cst_20 {dimension_numbers = #tpu.dot_dimension_numbers<[1], [0], [0], [1], [0, 0, 1, 1], [], []>} : vector<8x128xf32>, vector<128x4xf32>, vector<8x4xf32> -> vector<8x4xf32>
    %33 = arith.addf %24, %32 : vector<8x4xf32>
    %c0_21 = arith.constant 0 : index
    %c0_22 = arith.constant 0 : index
    %34 = vector.load %arg9[%c0_21, %c0_22] : memref<8x4xf32, #tpu.memory_space<vmem>>, vector<8x4xf32>
    tpu.vector_store %arg9[%c0_21, %c0_22], %33 {strides = array<i32>} : memref<8x4xf32, #tpu.memory_space<vmem>>, vector<8x4xf32>,
    return
  }
  func.func @transform_0(%arg0: i32) -> (i32, i32) {
    %c0_i32 = arith.constant 0 : i32
    %c0_i32_0 = arith.constant 0 : i32
    return %arg0, %c0_i32 : i32, i32
  }
  func.func @transform_1(%arg0: i32) -> (i32, i32) {
    %c0_i32 = arith.constant 0 : i32
    %c0_i32_0 = arith.constant 0 : i32
    %c0_i32_1 = arith.constant 0 : i32
    return %c0_i32, %c0_i32_0 : i32, i32
  }
  func.func @transform_2(%arg0: i32) -> (i32, i32) {
    %c0_i32 = arith.constant 0 : i32
    %c0_i32_0 = arith.constant 0 : i32
    %c0_i32_1 = arith.constant 0 : i32
    return %c0_i32, %c0_i32_0 : i32, i32
  }
  func.func @transform_3(%arg0: i32) -> (i32, i32) {
    %c0_i32 = arith.constant 0 : i32
    %c0_i32_0 = arith.constant 0 : i32
    %c0_i32_1 = arith.constant 0 : i32
    return %c0_i32, %c0_i32_0 : i32, i32
  }
  func.func @transform_4(%arg0: i32) -> (i32, i32) {
    %c0_i32 = arith.constant 0 : i32
    %c0_i32_0 = arith.constant 0 : i32
    %c0_i32_1 = arith.constant 0 : i32
    return %c0_i32, %c0_i32_0 : i32, i32
  }
  func.func @transform_5(%arg0: i32) -> (i32, i32) {
    %c0_i32 = arith.constant 0 : i32
    %c0_i32_0 = arith.constant 0 : i32
    %c0_i32_1 = arith.constant 0 : i32
    return %c0_i32, %c0_i32_0 : i32, i32
  }
  func.func @transform_6(%arg0: i32) -> (i32, i32) {
    %c0_i32 = arith.constant 0 : i32
    %c0_i32_0 = arith.constant 0 : i32
    %c0_i32_1 = arith.constant 0 : i32
    return %c0_i32, %c0_i32_0 : i32, i32
  }
  func.func @transform_7(%arg0: i32) -> (i32, i32) {
    %c0_i32 = arith.constant 0 : i32
    %c0_i32_0 = arith.constant 0 : i32
    %c0_i32_1 = arith.constant 0 : i32
    return %c0_i32, %c0_i32_0 : i32, i32
  }
  func.func @transform_8(%arg0: i32) -> (i32, i32) {
    %c0_i32 = arith.constant 0 : i32
    %c0_i32_0 = arith.constant 0 : i32
    return %arg0, %c0_i32 : i32, i32
  }
}

</mosaic_0001>

<llo_original>
// kernel: tpu_custom_call.1
$region0: #{tpu_custom_call.1}
  #allocation0 [shape = 'u32[]', space=smem, size = 0x4, offset = 0x4, fixed_abs, tag = 'smem constant byte address 0x4 - core index']
  #allocation1 [shape = 'u32[144,128]{1,0:T(1,128)}', space=vmem, size = 0x12000, scoped, tag = 'internal scratch']
  %s0 = inlined_call_operand.vmem [shape: f32[8,32], index: 0, kind: input, shape index: {}]
  %s1 = inlined_call_operand.vmem [shape: f32[32,256], index: 1, kind: input, shape index: {}]
  %s2 = inlined_call_operand.vmem [shape: f32[1,128], index: 2, kind: input, shape index: {}]
  %s3 = inlined_call_operand.vmem [shape: f32[1,128], index: 3, kind: input, shape index: {}]
  %s4 = inlined_call_operand.vmem [shape: f32[1,128], index: 4, kind: input, shape index: {}]
  %s5 = inlined_call_operand.vmem [shape: f32[128,128], index: 5, kind: input, shape index: {}]
  %s6 = inlined_call_operand.vmem [shape: f32[128,4], index: 6, kind: input, shape index: {}]
  %s7 = inlined_call_operand.vmem [shape: f32[128,4], index: 7, kind: input, shape index: {}]
  %s8 = inlined_call_operand.vmem [shape: f32[8,4], index: 8, kind: output, shape index: {}]
  %s9 = sld [smem:[#allocation0]]
  $region42: #{tpu_custom_call.1} parent=0
    _
  %s11 = ssub.s32 1, %s9
  %s12 = scalar_select 0, %s11, %s9
  // Predicated region
  $region2: #{tpu_custom_call.1} parent=0 // pred_check
    _
  $region3: #{tpu_custom_call.1} parent=0 // pred_check_branch
    %14 = sbr.rel (0) target = $region5
  $region4: #{tpu_custom_call.1} parent=0 // pred_region
    _
  $region5: #{tpu_custom_call.1} parent=0 // pred_fallthru
    _
  // Predicated region
  $region6: #{tpu_custom_call.1} parent=0 // pred_check
    _
  $region7: #{tpu_custom_call.1} parent=0 // pred_check_branch
    %16 = sbr.rel (0) target = $region9
  $region8: #{tpu_custom_call.1} parent=0 // pred_region
    _
  $region9: #{tpu_custom_call.1} parent=0 // pred_fallthru
    _
  // Predicated region
  $region10: #{tpu_custom_call.1} parent=0 // pred_check
    _
  $region11: #{tpu_custom_call.1} parent=0 // pred_check_branch
    %18 = sbr.rel (0) target = $region13
  $region12: #{tpu_custom_call.1} parent=0 // pred_region
    _
  $region13: #{tpu_custom_call.1} parent=0 // pred_fallthru
    _
  // Predicated region
  $region14: #{tpu_custom_call.1} parent=0 // pred_check
    _
  $region15: #{tpu_custom_call.1} parent=0 // pred_check_branch
    %20 = sbr.rel (0) target = $region17
  $region16: #{tpu_custom_call.1} parent=0 // pred_region
    _
  $region17: #{tpu_custom_call.1} parent=0 // pred_fallthru
    _
  // Predicated region
  $region18: #{tpu_custom_call.1} parent=0 // pred_check
    _
  $region19: #{tpu_custom_call.1} parent=0 // pred_check_branch
    %22 = sbr.rel (0) target = $region21
  $region20: #{tpu_custom_call.1} parent=0 // pred_region
    _
  $region21: #{tpu_custom_call.1} parent=0 // pred_fallthru
    _
  // Predicated region
  $region22: #{tpu_custom_call.1} parent=0 // pred_check
    _
  $region23: #{tpu_custom_call.1} parent=0 // pred_check_branch
    %24 = sbr.rel (0) target = $region25
  $region24: #{tpu_custom_call.1} parent=0 // pred_region
    _
  $region25: #{tpu_custom_call.1} parent=0 // pred_fallthru
    _
  // Predicated region
  $region26: #{tpu_custom_call.1} parent=0 // pred_check
    _
  $region27: #{tpu_custom_call.1} parent=0 // pred_check_branch
    %26 = sbr.rel (0) target = $region29
  $region28: #{tpu_custom_call.1} parent=0 // pred_region
    _
  $region29: #{tpu_custom_call.1} parent=0 // pred_fallthru
    _
  // Predicated region
  $region30: #{tpu_custom_call.1} parent=0 // pred_check
    _
  $region31: #{tpu_custom_call.1} parent=0 // pred_check_branch
    %28 = sbr.rel (0) target = $region33
  $region32: #{tpu_custom_call.1} parent=0 // pred_region
    _
  $region33: #{tpu_custom_call.1} parent=0 // pred_fallthru
    _
  %v29 = vld [vmem:[%s0] sm:$0xff]
  %v30 = vld [vmem:[%s1] sm:$0xff]
  %v31 = vld [vmem:[%s1 + $0x8] sm:$0xff]
  %v32 = vld [vmem:[%s1 + $0x10] sm:$0xff]
  %v33 = vld [vmem:[%s1 + $0x18] sm:$0xff]
  %v34 = vld [vmem:[%s1 + $0x20] sm:$0xff]
  %v35 = vld [vmem:[%s1 + $0x28] sm:$0xff]
  %v36 = vld [vmem:[%s1 + $0x30] sm:$0xff]
  %v37 = vld [vmem:[%s1 + $0x38] sm:$0xff]
  %vm38 = vcmask 261120
  %v40 = vsel %vm38, %v29, 0
  %42 = vmatprep.subr.mxu0 %v31
  %43 = vmatpush1.msra.mxu0 %v30
  %44 = vmatprep.subr.mxu0 %v33
  %45 = vmatpush1.msra.mxu0 %v32
  %46 = vmatprep.subr.mxu0 %v35
  %47 = vmatpush1.msra.mxu0 %v34
  %48 = vmatprep.subr.mxu0 %v37
  %49 = vmatpush1.msra.mxu0 %v36
  %50 = vmatprep.subr.mxu0 0.0
  %51 = vmatpush1.msra.mxu0 0.0
  %52 = vmatprep.subr.mxu0 0.0
  %53 = vmatpush1.msra.mxu0 0.0
  %54 = vmatprep.subr.mxu0 0.0
  %55 = vmatpush1.msra.mxu0 0.0
  %56 = vmatprep.subr.mxu0 0.0
  %57 = vmatpush1.msra.mxu0 0.0
  %58 = vmatprep.subr.mxu0 0.0
  %59 = vmatpush1.msra.mxu0 0.0
  %60 = vmatprep.subr.mxu0 0.0
  %61 = vmatpush1.msra.mxu0 0.0
  %62 = vmatprep.subr.mxu0 0.0
  %63 = vmatpush1.msra.mxu0 0.0
  %64 = vmatprep.subr.mxu0 0.0
  %65 = vmatpush1.msra.mxu0 0.0
  %66 = vmatprep.subr.mxu0 0.0
  %67 = vmatpush1.msra.mxu0 0.0
  %68 = vmatprep.subr.mxu0 0.0
  %69 = vmatpush1.msra.mxu0 0.0
  %70 = vmatprep.subr.mxu0 0.0
  %71 = vmatpush1.msra.mxu0 0.0
  %72 = vmatprep.subr.mxu0 0.0
  %73 = vmatpush1.msra.mxu0 0.0
  %74 = vmatprep.subr.mxu0 0.0
  %75 = vmatpush1.msra.mxu0 0.0
  %76 = vmatprep.subr.mxu0 0.0
  %77 = vmatpush1.msra.mxu0 0.0
  %78 = vmatprep.subr.mxu0 0.0
  %79 = vmatpush1.msra.mxu0 0.0
  %80 = vmatprep.subr.mxu0 0.0
  %81 = vmatpush1.msra.mxu0 0.0
  %82 = vmatprep.subr.mxu0 0.0
  %83 = vmatpush1.msra.mxu0 0.0
  %84 = vmatprep.subr.mxu0 0.0
  %85 = vmatpush1.msra.mxu0 0.0
  %86 = vmatprep.subr.mxu0 0.0
  %87 = vmatpush1.msra.mxu0 0.0
  %88 = vmatprep.subr.mxu0 0.0
  %89 = vmatpush1.msra.mxu0 0.0
  %90 = vmatprep.subr.mxu0 0.0
  %91 = vmatpush1.msra.mxu0 0.0
  %92 = vmatprep.subr.mxu0 0.0
  %93 = vmatpush1.msra.mxu0 0.0
  %94 = vmatprep.subr.mxu0 0.0
  %95 = vmatpush1.msra.mxu0 0.0
  %96 = vmatprep.subr.mxu0 0.0
  %97 = vmatpush1.msra.mxu0 0.0
  %98 = vmatprep.subr.mxu0 0.0
  %99 = vmatpush1.msra.mxu0 0.0
  %100 = vmatprep.subr.mxu0 0.0
  %101 = vmatpush1.msra.mxu0 0.0
  %102 = vmatprep.subr.mxu0 0.0
  %103 = vmatpush1.msra.mxu0 0.0
  %104 = vmatprep.subr.mxu0 0.0
  %105 = vmatpush1.msra.mxu0 0.0
  %106 = vmatprep.mubr.f32.mxu0 0.0
  %107 = vmatmul.mubr.f32.gmra.mrb[0].mxu0 %v40
  %v108 = vpop.f32.mrb[0].mxu0
  %v109 = vadd.f32 0.0, %v108
  %v110 = vpop.f32.mrb[0].mxu0
  %v111 = vadd.f32 0.0, %v110
  %112 = vdwg.mxu0
  %v113 = vld [vmem:[%s2] sm:$0x1]
  %v115 = vlaneseq
  %v116 = vshrl.u32 %v115, 7
  %v117 = vsub.s32 0, %v116
  %v118 = vrot.slane %v113, %v117
  %v120 = vadd.f32 %v109, %v118
  %v121 = vtanh.pop %v120
  %v122 = vmul.f32 %v121, %v121
  %v123 = vsub.f32 1.0, %v122
  %v124 = vld [vmem:[%s3] sm:$0x1]
  %v126 = vlaneseq
  %v127 = vshrl.u32 %v126, 7
  %v128 = vsub.s32 0, %v127
  %v129 = vrot.slane %v124, %v128
  %v131 = vmul.f32 %v129, %v123
  %v132 = vld [vmem:[%s5] sm:$0xff]
  %v133 = vld [vmem:[%s5 + $0x8] sm:$0xff]
  %v134 = vld [vmem:[%s5 + $0x10] sm:$0xff]
  %v135 = vld [vmem:[%s5 + $0x18] sm:$0xff]
  %v136 = vld [vmem:[%s5 + $0x20] sm:$0xff]
  %v137 = vld [vmem:[%s5 + $0x28] sm:$0xff]
  %v138 = vld [vmem:[%s5 + $0x30] sm:$0xff]
  %v139 = vld [vmem:[%s5 + $0x38] sm:$0xff]
  %v140 = vld [vmem:[%s5 + $0x40] sm:$0xff]
  %v141 = vld [vmem:[%s5 + $0x48] sm:$0xff]
  %v142 = vld [vmem:[%s5 + $0x50] sm:$0xff]
  %v143 = vld [vmem:[%s5 + $0x58] sm:$0xff]
  %v144 = vld [vmem:[%s5 + $0x60] sm:$0xff]
  %v145 = vld [vmem:[%s5 + $0x68] sm:$0xff]
  %v146 = vld [vmem:[%s5 + $0x70] sm:$0xff]
  %v147 = vld [vmem:[%s5 + $0x78] sm:$0xff]
  %148 = vmatprep.subr.mxu0 0.0
  %149 = vmatpush1.msra.mxu0 %v132
  %150 = vmatprep.subr.mxu0 0.0
  %151 = vmatpush1.msra.mxu0 %v133
  %152 = vmatprep.subr.mxu0 0.0
  %153 = vmatpush1.msra.mxu0 %v134
  %154 = vmatprep.subr.mxu0 0.0
  %155 = vmatpush1.msra.mxu0 %v135
  %156 = vmatprep.subr.mxu0 0.0
  %157 = vmatpush1.msra.mxu0 %v136
  %158 = vmatprep.subr.mxu0 0.0
  %159 = vmatpush1.msra.mxu0 %v137
  %160 = vmatprep.subr.mxu0 0.0
  %161 = vmatpush1.msra.mxu0 %v138
  %162 = vmatprep.subr.mxu0 0.0
  %163 = vmatpush1.msra.mxu0 %v139
  %164 = vmatprep.subr.mxu0 0.0
  %165 = vmatpush1.msra.mxu0 %v140
  %166 = vmatprep.subr.mxu0 0.0
  %167 = vmatpush1.msra.mxu0 %v141
  %168 = vmatprep.subr.mxu0 0.0
  %169 = vmatpush1.msra.mxu0 %v142
  %170 = vmatprep.subr.mxu0 0.0
  %171 = vmatpush1.msra.mxu0 %v143
  %172 = vmatprep.subr.mxu0 0.0
  %173 = vmatpush1.msra.mxu0 %v144
  %174 = vmatprep.subr.mxu0 0.0
  %175 = vmatpush1.msra.mxu0 %v145
  %176 = vmatprep.subr.mxu0 0.0
  %177 = vmatpush1.msra.mxu0 %v146
  %178 = vmatprep.subr.mxu0 0.0
  %179 = vmatpush1.msra.mxu0 %v147
  %180 = vmatprep.subr.mxu0 0.0
  %181 = vmatpush1.msra.mxu0 0.0
  %182 = vmatprep.subr.mxu0 0.0
  %183 = vmatpush1.msra.mxu0 0.0
  %184 = vmatprep.subr.mxu0 0.0
  %185 = vmatpush1.msra.mxu0 0.0
  %186 = vmatprep.subr.mxu0 0.0
  %187 = vmatpush1.msra.mxu0 0.0
  %188 = vmatprep.subr.mxu0 0.0
  %189 = vmatpush1.msra.mxu0 0.0
  %190 = vmatprep.subr.mxu0 0.0
  %191 = vmatpush1.msra.mxu0 0.0
  %192 = vmatprep.subr.mxu0 0.0
  %193 = vmatpush1.msra.mxu0 0.0
  %194 = vmatprep.subr.mxu0 0.0
  %195 = vmatpush1.msra.mxu0 0.0
  %196 = vmatprep.subr.mxu0 0.0
  %197 = vmatpush1.msra.mxu0 0.0
  %198 = vmatprep.subr.mxu0 0.0
  %199 = vmatpush1.msra.mxu0 0.0
  %200 = vmatprep.subr.mxu0 0.0
  %201 = vmatpush1.msra.mxu0 0.0
  %202 = vmatprep.subr.mxu0 0.0
  %203 = vmatpush1.msra.mxu0 0.0
  %204 = vmatprep.subr.mxu0 0.0
  %205 = vmatpush1.msra.mxu0 0.0
  %206 = vmatprep.subr.mxu0 0.0
  %207 = vmatpush1.msra.mxu0 0.0
  %208 = vmatprep.subr.mxu0 0.0
  %209 = vmatpush1.msra.mxu0 0.0
  %210 = vmatprep.subr.mxu0 0.0
  %211 = vmatpush1.msra.mxu0 0.0
  %212 = vmatprep.mubr.f32.mxu0 0.0
  %213 = vmatmul.mubr.f32.gmra.mrb[0].mxu0 %v131
  %v214 = vpop.f32.mrb[0].mxu0
  %v215 = vadd.f32 0.0, %v214
  %v216 = vpop.f32.mrb[0].mxu0
  %217 = vdwg.mxu0
  %v218 = vld [vmem:[%s4] sm:$0x1]
  %v219 = vmul.f32 %v121, %v123
  %v221 = vlaneseq
  %v222 = vshrl.u32 %v221, 7
  %v223 = vsub.s32 0, %v222
  %v224 = vrot.slane %v218, %v223
  %v226 = vmul.f32 %v224, %v219
  %v227 = vmul.f32 %v215, %v131
  %v228 = vadd.f32 %v226, %v227
  %v229 = vld [vmem:[%s6] sm:$0xff]
  %v230 = vld [vmem:[%s6 + $0x8] sm:$0xff]
  %v231 = vld [vmem:[%s6 + $0x10] sm:$0xff]
  %v232 = vld [vmem:[%s6 + $0x18] sm:$0xff]
  %v233 = vld [vmem:[%s6 + $0x20] sm:$0xff]
  %v234 = vld [vmem:[%s6 + $0x28] sm:$0xff]
  %v235 = vld [vmem:[%s6 + $0x30] sm:$0xff]
  %v236 = vld [vmem:[%s6 + $0x38] sm:$0xff]
  %v237 = vld [vmem:[%s6 + $0x40] sm:$0xff]
  %v238 = vld [vmem:[%s6 + $0x48] sm:$0xff]
  %v239 = vld [vmem:[%s6 + $0x50] sm:$0xff]
  %v240 = vld [vmem:[%s6 + $0x58] sm:$0xff]
  %v241 = vld [vmem:[%s6 + $0x60] sm:$0xff]
  %v242 = vld [vmem:[%s6 + $0x68] sm:$0xff]
  %v243 = vld [vmem:[%s6 + $0x70] sm:$0xff]
  %v244 = vld [vmem:[%s6 + $0x78] sm:$0xff]
  %v245 = vmul.f32 %v111, %v111
  %v246 = vsub.f32 0.0, %v245
  %v247 = vmul.f32 %v246, 2.0
  %v248 = vmul.f32 %v247, 1.442695
  %v249 = vpow.pop %v248
  %v250 = vld [vmem:[%s7] sm:$0xff]
  %v251 = vld [vmem:[%s7 + $0x8] sm:$0xff]
  %v252 = vld [vmem:[%s7 + $0x10] sm:$0xff]
  %v253 = vld [vmem:[%s7 + $0x18] sm:$0xff]
  %v254 = vld [vmem:[%s7 + $0x20] sm:$0xff]
  %v255 = vld [vmem:[%s7 + $0x28] sm:$0xff]
  %v256 = vld [vmem:[%s7 + $0x30] sm:$0xff]
  %v257 = vld [vmem:[%s7 + $0x38] sm:$0xff]
  %v258 = vld [vmem:[%s7 + $0x40] sm:$0xff]
  %v259 = vld [vmem:[%s7 + $0x48] sm:$0xff]
  %v260 = vld [vmem:[%s7 + $0x50] sm:$0xff]
  %v261 = vld [vmem:[%s7 + $0x58] sm:$0xff]
  %v262 = vld [vmem:[%s7 + $0x60] sm:$0xff]
  %v263 = vld [vmem:[%s7 + $0x68] sm:$0xff]
  %v264 = vld [vmem:[%s7 + $0x70] sm:$0xff]
  %v265 = vld [vmem:[%s7 + $0x78] sm:$0xff]
  %266 = vmatprep.subr.mxu0 0.0
  %267 = vmatpush1.msra.mxu0 %v250
  %268 = vmatprep.subr.mxu0 0.0
  %269 = vmatpush1.msra.mxu0 %v251
  %270 = vmatprep.subr.mxu0 0.0
  %271 = vmatpush1.msra.mxu0 %v252
  %272 = vmatprep.subr.mxu0 0.0
  %273 = vmatpush1.msra.mxu0 %v253
  %274 = vmatprep.subr.mxu0 0.0
  %275 = vmatpush1.msra.mxu0 %v254
  %276 = vmatprep.subr.mxu0 0.0
  %277 = vmatpush1.msra.mxu0 %v255
  %278 = vmatprep.subr.mxu0 0.0
  %279 = vmatpush1.msra.mxu0 %v256
  %280 = vmatprep.subr.mxu0 0.0
  %281 = vmatpush1.msra.mxu0 %v257
  %282 = vmatprep.subr.mxu0 0.0
  %283 = vmatpush1.msra.mxu0 %v258
  %284 = vmatprep.subr.mxu0 0.0
  %285 = vmatpush1.msra.mxu0 %v259
  %286 = vmatprep.subr.mxu0 0.0
  %287 = vmatpush1.msra.mxu0 %v260
  %288 = vmatprep.subr.mxu0 0.0
  %289 = vmatpush1.msra.mxu0 %v261
  %290 = vmatprep.subr.mxu0 0.0
  %291 = vmatpush1.msra.mxu0 %v262
  %292 = vmatprep.subr.mxu0 0.0
  %293 = vmatpush1.msra.mxu0 %v263
  %294 = vmatprep.subr.mxu0 0.0
  %295 = vmatpush1.msra.mxu0 %v264
  %296 = vmatprep.subr.mxu0 0.0
  %297 = vmatpush1.msra.mxu0 %v265
  %298 = vmatprep.subr.mxu0 0.0
  %299 = vmatpush1.msra.mxu0 0.0
  %300 = vmatprep.subr.mxu0 0.0
  %301 = vmatpush1.msra.mxu0 0.0
  %302 = vmatprep.subr.mxu0 0.0
  %303 = vmatpush1.msra.mxu0 0.0
  %304 = vmatprep.subr.mxu0 0.0
  %305 = vmatpush1.msra.mxu0 0.0
  %306 = vmatprep.subr.mxu0 0.0
  %307 = vmatpush1.msra.mxu0 0.0
  %308 = vmatprep.subr.mxu0 0.0
  %309 = vmatpush1.msra.mxu0 0.0
  %310 = vmatprep.subr.mxu0 0.0
  %311 = vmatpush1.msra.mxu0 0.0
  %312 = vmatprep.subr.mxu0 0.0
  %313 = vmatpush1.msra.mxu0 0.0
  %314 = vmatprep.subr.mxu0 0.0
  %315 = vmatpush1.msra.mxu0 0.0
  %316 = vmatprep.subr.mxu0 0.0
  %317 = vmatpush1.msra.mxu0 0.0
  %318 = vmatprep.subr.mxu0 0.0
  %319 = vmatpush1.msra.mxu0 0.0
  %320 = vmatprep.subr.mxu0 0.0
  %321 = vmatpush1.msra.mxu0 0.0
  %322 = vmatprep.subr.mxu0 0.0
  %323 = vmatpush1.msra.mxu0 0.0
  %324 = vmatprep.subr.mxu0 0.0
  %325 = vmatpush1.msra.mxu0 0.0
  %326 = vmatprep.subr.mxu0 0.0
  %327 = vmatpush1.msra.mxu0 0.0
  %328 = vmatprep.subr.mxu0 0.0
  %329 = vmatpush1.msra.mxu0 0.0
  %330 = vmatprep.mubr.f32.mxu0 0.0
  %331 = vmatmul.mubr.f32.gmra.mrb[0].mxu0 %v249
  %v332 = vpop.f32.mrb[0].mxu0
  %v333 = vadd.f32 0.0, %v332
  %v334 = vpop.f32.mrb[0].mxu0
  %335 = vdwg.mxu0
  %336 = vmatprep.subr.mxu0 0.0
  %337 = vmatpush1.msra.mxu0 %v229
  %338 = vmatprep.subr.mxu0 0.0
  %339 = vmatpush1.msra.mxu0 %v230
  %340 = vmatprep.subr.mxu0 0.0
  %341 = vmatpush1.msra.mxu0 %v231
  %342 = vmatprep.subr.mxu0 0.0
  %343 = vmatpush1.msra.mxu0 %v232
  %344 = vmatprep.subr.mxu0 0.0
  %345 = vmatpush1.msra.mxu0 %v233
  %346 = vmatprep.subr.mxu0 0.0
  %347 = vmatpush1.msra.mxu0 %v234
  %348 = vmatprep.subr.mxu0 0.0
  %349 = vmatpush1.msra.mxu0 %v235
  %350 = vmatprep.subr.mxu0 0.0
  %351 = vmatpush1.msra.mxu0 %v236
  %352 = vmatprep.subr.mxu0 0.0
  %353 = vmatpush1.msra.mxu0 %v237
  %354 = vmatprep.subr.mxu0 0.0
  %355 = vmatpush1.msra.mxu0 %v238
  %356 = vmatprep.subr.mxu0 0.0
  %357 = vmatpush1.msra.mxu0 %v239
  %358 = vmatprep.subr.mxu0 0.0
  %359 = vmatpush1.msra.mxu0 %v240
  %360 = vmatprep.subr.mxu0 0.0
  %361 = vmatpush1.msra.mxu0 %v241
  %362 = vmatprep.subr.mxu0 0.0
  %363 = vmatpush1.msra.mxu0 %v242
  %364 = vmatprep.subr.mxu0 0.0
  %365 = vmatpush1.msra.mxu0 %v243
  %366 = vmatprep.subr.mxu0 0.0
  %367 = vmatpush1.msra.mxu0 %v244
  %368 = vmatprep.subr.mxu0 0.0
  %369 = vmatpush1.msra.mxu0 0.0
  %370 = vmatprep.subr.mxu0 0.0
  %371 = vmatpush1.msra.mxu0 0.0
  %372 = vmatprep.subr.mxu0 0.0
  %373 = vmatpush1.msra.mxu0 0.0
  %374 = vmatprep.subr.mxu0 0.0
  %375 = vmatpush1.msra.mxu0 0.0
  %376 = vmatprep.subr.mxu0 0.0
  %377 = vmatpush1.msra.mxu0 0.0
  %378 = vmatprep.subr.mxu0 0.0
  %379 = vmatpush1.msra.mxu0 0.0
  %380 = vmatprep.subr.mxu0 0.0
  %381 = vmatpush1.msra.mxu0 0.0
  %382 = vmatprep.subr.mxu0 0.0
  %383 = vmatpush1.msra.mxu0 0.0
  %384 = vmatprep.subr.mxu0 0.0
  %385 = vmatpush1.msra.mxu0 0.0
  %386 = vmatprep.subr.mxu0 0.0
  %387 = vmatpush1.msra.mxu0 0.0
  %388 = vmatprep.subr.mxu0 0.0
  %389 = vmatpush1.msra.mxu0 0.0
  %390 = vmatprep.subr.mxu0 0.0
  %391 = vmatpush1.msra.mxu0 0.0
  %392 = vmatprep.subr.mxu0 0.0
  %393 = vmatpush1.msra.mxu0 0.0
  %394 = vmatprep.subr.mxu0 0.0
  %395 = vmatpush1.msra.mxu0 0.0
  %396 = vmatprep.subr.mxu0 0.0
  %397 = vmatpush1.msra.mxu0 0.0
  %398 = vmatprep.subr.mxu0 0.0
  %399 = vmatpush1.msra.mxu0 0.0
  %400 = vmatprep.mubr.f32.mxu0 0.0
  %401 = vmatmul.mubr.f32.gmra.mrb[0].mxu0 %v228
  %v402 = vpop.f32.mrb[0].mxu0
  %v403 = vadd.f32 %v333, %v402
  %v404 = vpop.f32.mrb[0].mxu0
  %405 = vdwg.mxu0
  %vm406 = vcmask 31744
  %407 = vst.msk [vmem:[%s8] sm:$0xff] %vm406, %v403
  // Predicated region
  $region34: #{tpu_custom_call.1} parent=0 // pred_check
    _
  $region35: #{tpu_custom_call.1} parent=0 // pred_check_branch
    %409 = sbr.rel (0) target = $region37
  $region36: #{tpu_custom_call.1} parent=0 // pred_region
    _
  $region37: #{tpu_custom_call.1} parent=0 // pred_fallthru
    _
  // Predicated region
  $region38: #{tpu_custom_call.1} parent=0 // pred_check
    _
  $region39: #{tpu_custom_call.1} parent=0 // pred_check_branch
    %411 = sbr.rel (0) target = $region41
  $region40: #{tpu_custom_call.1} parent=0 // pred_region
    _
  $region41: #{tpu_custom_call.1} parent=0 // pred_fallthru
    _

</llo_original>
